<compile_context>
chip_gen: v6e
topology: v6e:2x2x1
jax: 0.10.0
libtpu: 0.0.40
codegen_flags: <defaults>
</compile_context>

<pallas_src>
import functools

import jax
import jax.numpy as jnp
from jax.experimental import pallas as pl
from jax.experimental.pallas import tpu as pltpu

IN_FEATURES = 256
HIDDEN = 256
DOMAIN_NUM = 4
OUT_PAD = 128           # lane-dense padded output width (>= DOMAIN_NUM)
DROPOUT_P = 0.5
TILE_B_MAX = 512        # batch rows per grid step (512 * 256 * 4B = 512 KiB tile)


def _round_up(x, m):
    return ((x + m - 1) // m) * m


def _discriminator_kernel(seed_ref, x_ref, w1_ref, b1_ref, w2_ref, b2_ref, o_ref,
                          *, training, dropout_p):
    """One batch tile: (identity GRL) -> fc1 -> ReLU -> [Dropout] -> fc2 (padded).

    seed_ref: SMEM int32[1]            (scalar prefetch)
    x_ref:    VMEM (TILE_B, 256)
    w1_ref:   VMEM (256, 256)          (in x out layout)
    b1_ref:   VMEM (1, 256)
    w2_ref:   VMEM (256, OUT_PAD)      (in x out layout, zero-padded columns)
    b2_ref:   VMEM (1, OUT_PAD)        (zero-padded)
    o_ref:    VMEM (TILE_B, OUT_PAD)
    """
    x = x_ref[...]                      # GRL forward == identity

    # fc1 + ReLU (MXU matmul, f32 accumulation)
    h = jnp.dot(x, w1_ref[...], preferred_element_type=jnp.float32) + b1_ref[...]
    h = jnp.maximum(h, 0.0)

    if training and dropout_p > 0.0:
        tile_b, hidden = h.shape
        # Global element index, unique across batch tiles via program_id.
        row = jax.lax.broadcasted_iota(jnp.int32, (tile_b, hidden), 0)
        col = jax.lax.broadcasted_iota(jnp.int32, (tile_b, hidden), 1)
        grow = row + pl.program_id(0) * tile_b
        idx = (grow * hidden + col).astype(jnp.uint32)
        # lowbias32-style integer hash of (index, seed) -> uniform uint32.
        z = idx + seed_ref[0].astype(jnp.uint32) * jnp.uint32(0x9E3779B9)
        z = z ^ (z >> jnp.uint32(16))
        z = z * jnp.uint32(0x7FEB352D)
        z = z ^ (z >> jnp.uint32(15))
        z = z * jnp.uint32(0x846CA68B)
        z = z ^ (z >> jnp.uint32(16))
        keep_threshold = jnp.uint32(int(round((1.0 - dropout_p) * 4294967296.0)))
        keep = z < keep_threshold
        # Single select + scalar scale (inverted dropout, PyTorch semantics).
        h = jnp.where(keep, h, 0.0) * jnp.float32(1.0 / (1.0 - dropout_p))

    # fc2: padded to OUT_PAD lanes for an unmasked, lane-dense store.
    out = jnp.dot(h, w2_ref[...], preferred_element_type=jnp.float32) + b2_ref[...]
    o_ref[...] = out.astype(o_ref.dtype)


@functools.partial(jax.jit, static_argnames=("training", "tile_b_max"))
def discriminator_forward(feature, w1_t, b1, w2_t, b2, seed, *,
                          training=True, tile_b_max=TILE_B_MAX):
    """feature: (B, 256). w1_t: (256, 256), w2_t: (256, 4) in (in, out) layout."""
    B = feature.shape[0]

    # Batch tiling: rows per step is a multiple of 8 (sublanes), capped at tile_b_max.
    b8 = _round_up(B, 8)
    tile_b = min(tile_b_max, b8)
    b_pad = _round_up(b8, tile_b)
    feature = feature.astype(jnp.float32)
    if b_pad != B:
        feature = jnp.pad(feature, ((0, b_pad - B), (0, 0)))

    # Lane-dense output: pad fc2 weights/bias from DOMAIN_NUM -> OUT_PAD columns.
    w2_p = jnp.pad(w2_t.astype(jnp.float32), ((0, 0), (0, OUT_PAD - DOMAIN_NUM)))
    b2_p = jnp.pad(b2.astype(jnp.float32), (0, OUT_PAD - DOMAIN_NUM)).reshape(1, OUT_PAD)
    b1_2d = b1.astype(jnp.float32).reshape(1, HIDDEN)

    seed_arr = jnp.asarray([seed], dtype=jnp.int32)

    kernel = functools.partial(_discriminator_kernel,
                               training=training, dropout_p=DROPOUT_P)

    grid_spec = pltpu.PrefetchScalarGridSpec(
        num_scalar_prefetch=1,                                   # seed -> SMEM
        grid=(b_pad // tile_b,),
        in_specs=[
            pl.BlockSpec((tile_b, IN_FEATURES), lambda i, s: (i, 0)),   # x tile (pipelined)
            pl.BlockSpec((IN_FEATURES, HIDDEN), lambda i, s: (0, 0)),   # w1 (VMEM-resident)
            pl.BlockSpec((1, HIDDEN), lambda i, s: (0, 0)),             # b1 (resident)
            pl.BlockSpec((IN_FEATURES, OUT_PAD), lambda i, s: (0, 0)),  # w2 padded (resident)
            pl.BlockSpec((1, OUT_PAD), lambda i, s: (0, 0)),            # b2 padded (resident)
        ],
        out_specs=pl.BlockSpec((tile_b, OUT_PAD), lambda i, s: (i, 0)),
    )

    out = pl.pallas_call(
        kernel,
        grid_spec=grid_spec,
        out_shape=jax.ShapeDtypeStruct((b_pad, OUT_PAD), jnp.float32),
        compiler_params=pltpu.CompilerParams(
            dimension_semantics=("parallel",)),   # shard batch tiles over TCs
    )(seed_arr, feature, w1_t.astype(jnp.float32), b1_2d, w2_p, b2_p)

    return out[:B, :DOMAIN_NUM]


def init_params(key):
    """Deterministic PyTorch-style init: U(-1/sqrt(fan_in), 1/sqrt(fan_in))."""
    k1, k2, k3, k4 = jax.random.split(key, 4)
    bound1 = 1.0 / (IN_FEATURES ** 0.5)
    w1_pt = jax.random.uniform(k1, (HIDDEN, IN_FEATURES), jnp.float32, -bound1, bound1)
    b1 = jax.random.uniform(k2, (HIDDEN,), jnp.float32, -bound1, bound1)
    bound2 = 1.0 / (HIDDEN ** 0.5)
    w2_pt = jax.random.uniform(k3, (DOMAIN_NUM, HIDDEN), jnp.float32, -bound2, bound2)
    b2 = jax.random.uniform(k4, (DOMAIN_NUM,), jnp.float32, -bound2, bound2)
    # Pre-transpose to (in, out) for the kernel's x @ W layout.
    return w1_pt.T, b1, w2_pt.T, b2


if __name__ == "__main__":
    key = jax.random.PRNGKey(0)
    k_param, k_feat = jax.random.split(key)
    w1_t, b1, w2_t, b2 = init_params(k_param)

    B = 8
    feature = jax.random.normal(k_feat, (B, IN_FEATURES), jnp.float32)

    # Eval-mode run (dropout disabled) — check against a pure-JAX reference.
    out_eval = discriminator_forward(feature, w1_t, b1, w2_t, b2, 0, training=False)
    out_eval = jax.block_until_ready(out_eval)
    ref = jnp.maximum(feature @ w1_t + b1, 0.0) @ w2_t + b2
    assert out_eval.shape == (B, DOMAIN_NUM)
    assert jnp.allclose(out_eval, ref, atol=1e-4, rtol=1e-4)

    # Training-mode run (dropout active, like PyTorch default .train() mode).
    out_train = discriminator_forward(feature, w1_t, b1, w2_t, b2, 123, training=True)
    out_train = jax.block_until_ready(out_train)
    assert out_train.shape == (B, DOMAIN_NUM)
    assert bool(jnp.all(jnp.isfinite(out_train)))

    print("KERNEL_OK")
</pallas_src>

<mosaic_0001>
module attributes {stable_mosaic.version = 11 : i64} {
  func.func @_discriminator_kernel(%arg0: i32, %arg1: memref<1xi32, #tpu.memory_space<smem>>, %arg2: memref<8x256xf32, #tpu.memory_space<vmem>>, %arg3: memref<256x256xf32, #tpu.memory_space<vmem>>, %arg4: memref<1x256xf32, #tpu.memory_space<vmem>>, %arg5: memref<256x128xf32, #tpu.memory_space<vmem>>, %arg6: memref<1x128xf32, #tpu.memory_space<vmem>>, %arg7: memref<8x128xf32, #tpu.memory_space<vmem>>) attributes {dimension_semantics = [#tpu.dimension_semantics<parallel>], iteration_bounds = array<i64: 1>, scalar_prefetch = 1 : i64, scratch_operands = 0 : i64, tpu.core_type = #tpu.core_type<tc>, window_params = [{transform_indices = @transform_0, window_bounds = array<i64: 8, 256>}, {pipeline_mode = #tpu.pipeline_mode<synchronous>, transform_indices = @transform_1, window_bounds = array<i64: 256, 256>}, {pipeline_mode = #tpu.pipeline_mode<synchronous>, transform_indices = @transform_2, window_bounds = array<i64: 1, 256>}, {pipeline_mode = #tpu.pipeline_mode<synchronous>, transform_indices = @transform_3, window_bounds = array<i64: 256, 128>}, {pipeline_mode = #tpu.pipeline_mode<synchronous>, transform_indices = @transform_4, window_bounds = array<i64: 1, 128>}, {transform_indices = @transform_5, window_bounds = array<i64: 8, 128>}]} {
    %c0 = arith.constant 0 : index
    %c0_0 = arith.constant 0 : index
    %0 = vector.load %arg2[%c0, %c0_0] : memref<8x256xf32, #tpu.memory_space<vmem>>, vector<8x256xf32>
    %c0_1 = arith.constant 0 : index
    %c0_2 = arith.constant 0 : index
    %1 = vector.load %arg3[%c0_1, %c0_2] : memref<256x256xf32, #tpu.memory_space<vmem>>, vector<256x256xf32>
    %cst = arith.constant dense<0.000000e+00> : vector<8x256xf32>
    %2 = tpu.matmul %0, %1, %cst {dimension_numbers = #tpu.dot_dimension_numbers<[1], [0], [0], [1], [0, 0, 1, 1], [], []>} : vector<8x256xf32>, vector<256x256xf32>, vector<8x256xf32> -> vector<8x256xf32>
    %c0_3 = arith.constant 0 : index
    %c0_4 = arith.constant 0 : index
    %3 = vector.load %arg4[%c0_3, %c0_4] : memref<1x256xf32, #tpu.memory_space<vmem>>, vector<1x256xf32>
    %4 = vector.broadcast %3 : vector<1x256xf32> to vector<8x256xf32>
    %5 = arith.addf %2, %4 : vector<8x256xf32>
    %cst_5 = arith.constant 0.000000e+00 : f32
    %6 = vector.broadcast %cst_5 : f32 to vector<8x256xf32>
    %7 = arith.maximumf %5, %6 : vector<8x256xf32>
    %c0_6 = arith.constant 0 : index
    %c0_7 = arith.constant 0 : index
    %8 = vector.load %arg5[%c0_6, %c0_7] : memref<256x128xf32, #tpu.memory_space<vmem>>, vector<256x128xf32>
    %cst_8 = arith.constant dense<0.000000e+00> : vector<8x128xf32>
    %9 = tpu.matmul %7, %8, %cst_8 {dimension_numbers = #tpu.dot_dimension_numbers<[1], [0], [0], [1], [0, 0, 1, 1], [], []>} : vector<8x256xf32>, vector<256x128xf32>, vector<8x128xf32> -> vector<8x128xf32>
    %c0_9 = arith.constant 0 : index
    %c0_10 = arith.constant 0 : index
    %10 = vector.load %arg6[%c0_9, %c0_10] : memref<1x128xf32, #tpu.memory_space<vmem>>, vector<1x128xf32>
    %11 = vector.broadcast %10 : vector<1x128xf32> to vector<8x128xf32>
    %12 = arith.addf %9, %11 : vector<8x128xf32>
    %c0_11 = arith.constant 0 : index
    %c0_12 = arith.constant 0 : index
    %13 = vector.load %arg7[%c0_11, %c0_12] : memref<8x128xf32, #tpu.memory_space<vmem>>, vector<8x128xf32>
    tpu.vector_store %arg7[%c0_11, %c0_12], %12 {strides = array<i32>} : memref<8x128xf32, #tpu.memory_space<vmem>>, vector<8x128xf32>,
    return
  }
  func.func @transform_0(%arg0: i32, %arg1: memref<1xi32, #tpu.memory_space<smem>>) -> (i32, i32) {
    %c0_i32 = arith.constant 0 : i32
    %c0_i32_0 = arith.constant 0 : i32
    return %arg0, %c0_i32 : i32, i32
  }
  func.func @transform_1(%arg0: i32, %arg1: memref<1xi32, #tpu.memory_space<smem>>) -> (i32, i32) {
    %c0_i32 = arith.constant 0 : i32
    %c0_i32_0 = arith.constant 0 : i32
    %c0_i32_1 = arith.constant 0 : i32
    return %c0_i32, %c0_i32_0 : i32, i32
  }
  func.func @transform_2(%arg0: i32, %arg1: memref<1xi32, #tpu.memory_space<smem>>) -> (i32, i32) {
    %c0_i32 = arith.constant 0 : i32
    %c0_i32_0 = arith.constant 0 : i32
    %c0_i32_1 = arith.constant 0 : i32
    return %c0_i32, %c0_i32_0 : i32, i32
  }
  func.func @transform_3(%arg0: i32, %arg1: memref<1xi32, #tpu.memory_space<smem>>) -> (i32, i32) {
    %c0_i32 = arith.constant 0 : i32
    %c0_i32_0 = arith.constant 0 : i32
    %c0_i32_1 = arith.constant 0 : i32
    return %c0_i32, %c0_i32_0 : i32, i32
  }
  func.func @transform_4(%arg0: i32, %arg1: memref<1xi32, #tpu.memory_space<smem>>) -> (i32, i32) {
    %c0_i32 = arith.constant 0 : i32
    %c0_i32_0 = arith.constant 0 : i32
    %c0_i32_1 = arith.constant 0 : i32
    return %c0_i32, %c0_i32_0 : i32, i32
  }
  func.func @transform_5(%arg0: i32, %arg1: memref<1xi32, #tpu.memory_space<smem>>) -> (i32, i32) {
    %c0_i32 = arith.constant 0 : i32
    %c0_i32_0 = arith.constant 0 : i32
    return %arg0, %c0_i32 : i32, i32
  }
}

</mosaic_0001>

<llo_original>
// kernel: discriminator_forward.1
$region0: #{discriminator_forward.1}
  #allocation0 [shape = 'u32[]', space=smem, size = 0x4, offset = 0x4, fixed_abs, tag = 'smem constant byte address 0x4 - core index']
  #allocation1 [shape = 'u32[144,128]{1,0:T(1,128)}', space=vmem, size = 0x12000, scoped, tag = 'internal scratch']
  #allocation2 [shape = 's32[1]{0}', space=sflag, size = 0x4, scoped, tag = 'scoped memory for discriminator_forward.1']
  #allocation3 [shape = 's32[1]{0:T(128)S(6)}', space=smem, size = 0x200, scoped, tag = 'prefetched SMEM operand 0']
  %s0 = inlined_call_operand.<no memory space> [shape: s32[1], index: 0, kind: input, shape index: {}]
  %s1 = inlined_call_operand.vmem [shape: f32[8,256], index: 1, kind: input, shape index: {}]
  %s2 = inlined_call_operand.vmem [shape: f32[256,256], index: 2, kind: input, shape index: {}]
  %s3 = inlined_call_operand.vmem [shape: f32[1,256], index: 3, kind: input, shape index: {}]
  %s4 = inlined_call_operand.vmem [shape: f32[256,128], index: 4, kind: input, shape index: {}]
  %s5 = inlined_call_operand.vmem [shape: f32[1,128], index: 5, kind: input, shape index: {}]
  %s6 = inlined_call_operand.vmem [shape: f32[8,128], index: 6, kind: output, shape index: {}]
  %s7 = sld [smem:[#allocation0]]
  $region30: #{discriminator_forward.1} parent=0
    _
  %s9 = ssub.s32 1, %s7
  %s10 = scalar_select 0, %s9, %s7
  %11 = sst [smem:[#allocation3]] %s0
  // Predicated region
  $region2: #{discriminator_forward.1} parent=0 // pred_check
    _
  $region3: #{discriminator_forward.1} parent=0 // pred_check_branch
    %13 = sbr.rel (0) target = $region5
  $region4: #{discriminator_forward.1} parent=0 // pred_region
    _
  $region5: #{discriminator_forward.1} parent=0 // pred_fallthru
    _
  // Predicated region
  $region6: #{discriminator_forward.1} parent=0 // pred_check
    _
  $region7: #{discriminator_forward.1} parent=0 // pred_check_branch
    %15 = sbr.rel (0) target = $region9
  $region8: #{discriminator_forward.1} parent=0 // pred_region
    _
  $region9: #{discriminator_forward.1} parent=0 // pred_fallthru
    _
  // Predicated region
  $region10: #{discriminator_forward.1} parent=0 // pred_check
    _
  $region11: #{discriminator_forward.1} parent=0 // pred_check_branch
    %17 = sbr.rel (0) target = $region13
  $region12: #{discriminator_forward.1} parent=0 // pred_region
    _
  $region13: #{discriminator_forward.1} parent=0 // pred_fallthru
    _
  // Predicated region
  $region14: #{discriminator_forward.1} parent=0 // pred_check
    _
  $region15: #{discriminator_forward.1} parent=0 // pred_check_branch
    %19 = sbr.rel (0) target = $region17
  $region16: #{discriminator_forward.1} parent=0 // pred_region
    _
  $region17: #{discriminator_forward.1} parent=0 // pred_fallthru
    _
  // Predicated region
  $region18: #{discriminator_forward.1} parent=0 // pred_check
    _
  $region19: #{discriminator_forward.1} parent=0 // pred_check_branch
    %21 = sbr.rel (0) target = $region21
  $region20: #{discriminator_forward.1} parent=0 // pred_region
    _
  $region21: #{discriminator_forward.1} parent=0 // pred_fallthru
    _
  %v22 = vld [vmem:[%s1] sm:$0xff]
  %v23 = vld [vmem:[%s1 + $0x8] sm:$0xff]
  %v24 = vld [vmem:[%s2] sm:$0xff]
  %v25 = vld [vmem:[%s2 + $0x8] sm:$0xff]
  %v26 = vld [vmem:[%s2 + $0x10] sm:$0xff]
  %v27 = vld [vmem:[%s2 + $0x18] sm:$0xff]
  %v28 = vld [vmem:[%s2 + $0x20] sm:$0xff]
  %v29 = vld [vmem:[%s2 + $0x28] sm:$0xff]
  %v30 = vld [vmem:[%s2 + $0x30] sm:$0xff]
  %v31 = vld [vmem:[%s2 + $0x38] sm:$0xff]
  %v32 = vld [vmem:[%s2 + $0x40] sm:$0xff]
  %v33 = vld [vmem:[%s2 + $0x48] sm:$0xff]
  %v34 = vld [vmem:[%s2 + $0x50] sm:$0xff]
  %v35 = vld [vmem:[%s2 + $0x58] sm:$0xff]
  %v36 = vld [vmem:[%s2 + $0x60] sm:$0xff]
  %v37 = vld [vmem:[%s2 + $0x68] sm:$0xff]
  %v38 = vld [vmem:[%s2 + $0x70] sm:$0xff]
  %v39 = vld [vmem:[%s2 + $0x78] sm:$0xff]
  %v40 = vld [vmem:[%s2 + $0x80] sm:$0xff]
  %v41 = vld [vmem:[%s2 + $0x88] sm:$0xff]
  %v42 = vld [vmem:[%s2 + $0x90] sm:$0xff]
  %v43 = vld [vmem:[%s2 + $0x98] sm:$0xff]
  %v44 = vld [vmem:[%s2 + $0xa0] sm:$0xff]
  %v45 = vld [vmem:[%s2 + $0xa8] sm:$0xff]
  %v46 = vld [vmem:[%s2 + $0xb0] sm:$0xff]
  %v47 = vld [vmem:[%s2 + $0xb8] sm:$0xff]
  %v48 = vld [vmem:[%s2 + $0xc0] sm:$0xff]
  %v49 = vld [vmem:[%s2 + $0xc8] sm:$0xff]
  %v50 = vld [vmem:[%s2 + $0xd0] sm:$0xff]
  %v51 = vld [vmem:[%s2 + $0xd8] sm:$0xff]
  %v52 = vld [vmem:[%s2 + $0xe0] sm:$0xff]
  %v53 = vld [vmem:[%s2 + $0xe8] sm:$0xff]
  %v54 = vld [vmem:[%s2 + $0xf0] sm:$0xff]
  %v55 = vld [vmem:[%s2 + $0xf8] sm:$0xff]
  %v56 = vld [vmem:[%s2 + $0x100] sm:$0xff]
  %v57 = vld [vmem:[%s2 + $0x108] sm:$0xff]
  %v58 = vld [vmem:[%s2 + $0x110] sm:$0xff]
  %v59 = vld [vmem:[%s2 + $0x118] sm:$0xff]
  %v60 = vld [vmem:[%s2 + $0x120] sm:$0xff]
  %v61 = vld [vmem:[%s2 + $0x128] sm:$0xff]
  %v62 = vld [vmem:[%s2 + $0x130] sm:$0xff]
  %v63 = vld [vmem:[%s2 + $0x138] sm:$0xff]
  %v64 = vld [vmem:[%s2 + $0x140] sm:$0xff]
  %v65 = vld [vmem:[%s2 + $0x148] sm:$0xff]
  %v66 = vld [vmem:[%s2 + $0x150] sm:$0xff]
  %v67 = vld [vmem:[%s2 + $0x158] sm:$0xff]
  %v68 = vld [vmem:[%s2 + $0x160] sm:$0xff]
  %v69 = vld [vmem:[%s2 + $0x168] sm:$0xff]
  %v70 = vld [vmem:[%s2 + $0x170] sm:$0xff]
  %v71 = vld [vmem:[%s2 + $0x178] sm:$0xff]
  %v72 = vld [vmem:[%s2 + $0x180] sm:$0xff]
  %v73 = vld [vmem:[%s2 + $0x188] sm:$0xff]
  %v74 = vld [vmem:[%s2 + $0x190] sm:$0xff]
  %v75 = vld [vmem:[%s2 + $0x198] sm:$0xff]
  %v76 = vld [vmem:[%s2 + $0x1a0] sm:$0xff]
  %v77 = vld [vmem:[%s2 + $0x1a8] sm:$0xff]
  %v78 = vld [vmem:[%s2 + $0x1b0] sm:$0xff]
  %v79 = vld [vmem:[%s2 + $0x1b8] sm:$0xff]
  %v80 = vld [vmem:[%s2 + $0x1c0] sm:$0xff]
  %v81 = vld [vmem:[%s2 + $0x1c8] sm:$0xff]
  %v82 = vld [vmem:[%s2 + $0x1d0] sm:$0xff]
  %v83 = vld [vmem:[%s2 + $0x1d8] sm:$0xff]
  %v84 = vld [vmem:[%s2 + $0x1e0] sm:$0xff]
  %v85 = vld [vmem:[%s2 + $0x1e8] sm:$0xff]
  %v86 = vld [vmem:[%s2 + $0x1f0] sm:$0xff]
  %v87 = vld [vmem:[%s2 + $0x1f8] sm:$0xff]
  %v88 = vld [vmem:[%s3] sm:$0x3]
  %v90 = vlaneseq
  %v91 = vshrl.u32 %v90, 7
  %v92 = vsub.s32 0, %v91
  %v93 = vrot.slane %v88, %v92
  %v94 = vlaneseq
  %v95 = vshrl.u32 %v94, 7
  %v96 = vsub.s32 1, %v95
  %v97 = vrot.slane %v88, %v96
  %100 = vmatprep.subr.mxu0 %v55
  %101 = vmatpush1.msra.mxu0 %v54
  %102 = vmatprep.subr.mxu0 %v53
  %103 = vmatpush1.msra.mxu0 %v52
  %104 = vmatprep.subr.mxu0 %v51
  %105 = vmatpush1.msra.mxu0 %v50
  %106 = vmatprep.subr.mxu0 %v49
  %107 = vmatpush1.msra.mxu0 %v48
  %108 = vmatprep.subr.mxu0 %v47
  %109 = vmatpush1.msra.mxu0 %v46
  %110 = vmatprep.subr.mxu0 %v45
  %111 = vmatpush1.msra.mxu0 %v44
  %112 = vmatprep.subr.mxu0 %v43
  %113 = vmatpush1.msra.mxu0 %v42
  %114 = vmatprep.subr.mxu0 %v41
  %115 = vmatpush1.msra.mxu0 %v40
  %116 = vmatprep.subr.mxu0 %v39
  %117 = vmatpush1.msra.mxu0 %v38
  %118 = vmatprep.subr.mxu0 %v37
  %119 = vmatpush1.msra.mxu0 %v36
  %120 = vmatprep.subr.mxu0 %v35
  %121 = vmatpush1.msra.mxu0 %v34
  %122 = vmatprep.subr.mxu0 %v33
  %123 = vmatpush1.msra.mxu0 %v32
  %124 = vmatprep.subr.mxu0 %v31
  %125 = vmatpush1.msra.mxu0 %v30
  %126 = vmatprep.subr.mxu0 %v29
  %127 = vmatpush1.msra.mxu0 %v28
  %128 = vmatprep.subr.mxu0 %v27
  %129 = vmatpush1.msra.mxu0 %v26
  %130 = vmatprep.subr.mxu0 %v25
  %131 = vmatpush1.msra.mxu0 %v24
  %132 = vmatprep.subr.mxu0 %v87
  %133 = vmatpush2.msra.mxu0 %v86
  %134 = vmatprep.subr.mxu0 %v85
  %135 = vmatpush2.msra.mxu0 %v84
  %136 = vmatprep.subr.mxu0 %v83
  %137 = vmatpush2.msra.mxu0 %v82
  %138 = vmatprep.subr.mxu0 %v81
  %139 = vmatpush2.msra.mxu0 %v80
  %140 = vmatprep.subr.mxu0 %v79
  %141 = vmatpush2.msra.mxu0 %v78
  %142 = vmatprep.subr.mxu0 %v77
  %143 = vmatpush2.msra.mxu0 %v76
  %144 = vmatprep.subr.mxu0 %v75
  %145 = vmatpush2.msra.mxu0 %v74
  %146 = vmatprep.subr.mxu0 %v73
  %147 = vmatpush2.msra.mxu0 %v72
  %148 = vmatprep.subr.mxu0 %v71
  %149 = vmatpush2.msra.mxu0 %v70
  %150 = vmatprep.subr.mxu0 %v69
  %151 = vmatpush2.msra.mxu0 %v68
  %152 = vmatprep.subr.mxu0 %v67
  %153 = vmatpush2.msra.mxu0 %v66
  %154 = vmatprep.subr.mxu0 %v65
  %155 = vmatpush2.msra.mxu0 %v64
  %156 = vmatprep.subr.mxu0 %v63
  %157 = vmatpush2.msra.mxu0 %v62
  %158 = vmatprep.subr.mxu0 %v61
  %159 = vmatpush2.msra.mxu0 %v60
  %160 = vmatprep.subr.mxu0 %v59
  %161 = vmatpush2.msra.mxu0 %v58
  %162 = vmatprep.subr.mxu0 %v57
  %163 = vmatpush2.msra.mxu0 %v56
  %164 = vmatprep.mubr.f32.mxu0 %v23
  %165 = vmatmul.mubr.f32.gmra.mxu0 %v22
  %v166 = vpop.f32.mrf.mxu0
  %v167 = vadd.f32 %v93, %v166
  %v168 = vpop.f32.mrf.mxu0
  %v169 = vadd.f32 %v97, %v168
  %170 = vdwg.mxu0
  %v171 = vmax.f32 %v167, 0.0
  %v172 = vmax.f32 %v169, 0.0
  %v173 = vld [vmem:[%s4] sm:$0xff]
  %v174 = vld [vmem:[%s4 + $0x8] sm:$0xff]
  %v175 = vld [vmem:[%s4 + $0x10] sm:$0xff]
  %v176 = vld [vmem:[%s4 + $0x18] sm:$0xff]
  %v177 = vld [vmem:[%s4 + $0x20] sm:$0xff]
  %v178 = vld [vmem:[%s4 + $0x28] sm:$0xff]
  %v179 = vld [vmem:[%s4 + $0x30] sm:$0xff]
  %v180 = vld [vmem:[%s4 + $0x38] sm:$0xff]
  %v181 = vld [vmem:[%s4 + $0x40] sm:$0xff]
  %v182 = vld [vmem:[%s4 + $0x48] sm:$0xff]
  %v183 = vld [vmem:[%s4 + $0x50] sm:$0xff]
  %v184 = vld [vmem:[%s4 + $0x58] sm:$0xff]
  %v185 = vld [vmem:[%s4 + $0x60] sm:$0xff]
  %v186 = vld [vmem:[%s4 + $0x68] sm:$0xff]
  %v187 = vld [vmem:[%s4 + $0x70] sm:$0xff]
  %v188 = vld [vmem:[%s4 + $0x78] sm:$0xff]
  %v189 = vld [vmem:[%s4 + $0x80] sm:$0xff]
  %v190 = vld [vmem:[%s4 + $0x88] sm:$0xff]
  %v191 = vld [vmem:[%s4 + $0x90] sm:$0xff]
  %v192 = vld [vmem:[%s4 + $0x98] sm:$0xff]
  %v193 = vld [vmem:[%s4 + $0xa0] sm:$0xff]
  %v194 = vld [vmem:[%s4 + $0xa8] sm:$0xff]
  %v195 = vld [vmem:[%s4 + $0xb0] sm:$0xff]
  %v196 = vld [vmem:[%s4 + $0xb8] sm:$0xff]
  %v197 = vld [vmem:[%s4 + $0xc0] sm:$0xff]
  %v198 = vld [vmem:[%s4 + $0xc8] sm:$0xff]
  %v199 = vld [vmem:[%s4 + $0xd0] sm:$0xff]
  %v200 = vld [vmem:[%s4 + $0xd8] sm:$0xff]
  %v201 = vld [vmem:[%s4 + $0xe0] sm:$0xff]
  %v202 = vld [vmem:[%s4 + $0xe8] sm:$0xff]
  %v203 = vld [vmem:[%s4 + $0xf0] sm:$0xff]
  %v204 = vld [vmem:[%s4 + $0xf8] sm:$0xff]
  %v205 = vld [vmem:[%s5] sm:$0x1]
  %v207 = vlaneseq
  %v208 = vshrl.u32 %v207, 7
  %v209 = vsub.s32 0, %v208
  %v210 = vrot.slane %v205, %v209
  %212 = vmatprep.subr.mxu0 0.0
  %213 = vmatpush1.msra.mxu0 %v188
  %214 = vmatprep.subr.mxu0 0.0
  %215 = vmatpush1.msra.mxu0 %v187
  %216 = vmatprep.subr.mxu0 0.0
  %217 = vmatpush1.msra.mxu0 %v186
  %218 = vmatprep.subr.mxu0 0.0
  %219 = vmatpush1.msra.mxu0 %v185
  %220 = vmatprep.subr.mxu0 0.0
  %221 = vmatpush1.msra.mxu0 %v184
  %222 = vmatprep.subr.mxu0 0.0
  %223 = vmatpush1.msra.mxu0 %v183
  %224 = vmatprep.subr.mxu0 0.0
  %225 = vmatpush1.msra.mxu0 %v182
  %226 = vmatprep.subr.mxu0 0.0
  %227 = vmatpush1.msra.mxu0 %v181
  %228 = vmatprep.subr.mxu0 0.0
  %229 = vmatpush1.msra.mxu0 %v180
  %230 = vmatprep.subr.mxu0 0.0
  %231 = vmatpush1.msra.mxu0 %v179
  %232 = vmatprep.subr.mxu0 0.0
  %233 = vmatpush1.msra.mxu0 %v178
  %234 = vmatprep.subr.mxu0 0.0
  %235 = vmatpush1.msra.mxu0 %v177
  %236 = vmatprep.subr.mxu0 0.0
  %237 = vmatpush1.msra.mxu0 %v176
  %238 = vmatprep.subr.mxu0 0.0
  %239 = vmatpush1.msra.mxu0 %v175
  %240 = vmatprep.subr.mxu0 0.0
  %241 = vmatpush1.msra.mxu0 %v174
  %242 = vmatprep.subr.mxu0 0.0
  %243 = vmatpush1.msra.mxu0 %v173
  %244 = vmatprep.subr.mxu0 0.0
  %245 = vmatpush2.msra.mxu0 %v204
  %246 = vmatprep.subr.mxu0 0.0
  %247 = vmatpush2.msra.mxu0 %v203
  %248 = vmatprep.subr.mxu0 0.0
  %249 = vmatpush2.msra.mxu0 %v202
  %250 = vmatprep.subr.mxu0 0.0
  %251 = vmatpush2.msra.mxu0 %v201
  %252 = vmatprep.subr.mxu0 0.0
  %253 = vmatpush2.msra.mxu0 %v200
  %254 = vmatprep.subr.mxu0 0.0
  %255 = vmatpush2.msra.mxu0 %v199
  %256 = vmatprep.subr.mxu0 0.0
  %257 = vmatpush2.msra.mxu0 %v198
  %258 = vmatprep.subr.mxu0 0.0
  %259 = vmatpush2.msra.mxu0 %v197
  %260 = vmatprep.subr.mxu0 0.0
  %261 = vmatpush2.msra.mxu0 %v196
  %262 = vmatprep.subr.mxu0 0.0
  %263 = vmatpush2.msra.mxu0 %v195
  %264 = vmatprep.subr.mxu0 0.0
  %265 = vmatpush2.msra.mxu0 %v194
  %266 = vmatprep.subr.mxu0 0.0
  %267 = vmatpush2.msra.mxu0 %v193
  %268 = vmatprep.subr.mxu0 0.0
  %269 = vmatpush2.msra.mxu0 %v192
  %270 = vmatprep.subr.mxu0 0.0
  %271 = vmatpush2.msra.mxu0 %v191
  %272 = vmatprep.subr.mxu0 0.0
  %273 = vmatpush2.msra.mxu0 %v190
  %274 = vmatprep.subr.mxu0 0.0
  %275 = vmatpush2.msra.mxu0 %v189
  %276 = vmatprep.mubr.f32.mxu0 %v172
  %277 = vmatmul.mubr.f32.gmra.mxu0 %v171
  %v278 = vpop.f32.mrf.mxu0
  %v279 = vadd.f32 %v210, %v278
  %v280 = vpop.f32.mrf.mxu0
  %281 = vdwg.mxu0
  %282 = vst [vmem:[%s6] sm:$0xff] %v279
  // Predicated region
  $region22: #{discriminator_forward.1} parent=0 // pred_check
    _
  $region23: #{discriminator_forward.1} parent=0 // pred_check_branch
    %284 = sbr.rel (0) target = $region25
  $region24: #{discriminator_forward.1} parent=0 // pred_region
    _
  $region25: #{discriminator_forward.1} parent=0 // pred_fallthru
    _
  // Predicated region
  $region26: #{discriminator_forward.1} parent=0 // pred_check
    _
  $region27: #{discriminator_forward.1} parent=0 // pred_check_branch
    %286 = sbr.rel (0) target = $region29
  $region28: #{discriminator_forward.1} parent=0 // pred_region
    _
  $region29: #{discriminator_forward.1} parent=0 // pred_fallthru
    _

</llo_original>
